<compile_context>
chip_gen: v7x
topology: tpu7x:2x2x1
jax: 0.10.0
libtpu: 0.0.40
codegen_flags: <defaults>
</compile_context>

<pallas_src>
import functools

import jax
import jax.numpy as jnp
from jax.experimental import pallas as pl
from jax.experimental.pallas import tpu as pltpu

_SUBLANES = 8  # f32 accumulator sublane pack


def _ceil_to(x, m):
    return -(-x // m) * m


def _mean_agg_kernel(msg_ref, out_ref, acc_ref, *, inv_n):
    """Partial-sum one (tile_n, tile_d) message tile into an (8, tile_d) acc."""
    step = pl.program_id(1)  # reduction step over the row (N) axis

    @pl.when(step == 0)
    def _init():
        acc_ref[...] = jnp.zeros_like(acc_ref)

    tile = msg_ref[...].astype(jnp.float32)
    tn, td = tile.shape  # static at trace time
    # Sum groups of 8 rows on the VPU (plain vreg adds); keep 8 sublane
    # partials so no cross-sublane (XLU) reduce is paid per grid step.
    acc_ref[...] += tile.reshape(tn // _SUBLANES, _SUBLANES, td).sum(axis=0)

    @pl.when(step == pl.num_programs(1) - 1)
    def _finalize():
        # Single cross-sublane collapse + 1/N scale, paid once per D tile.
        total = acc_ref[...].sum(axis=0, keepdims=True)
        out_ref[...] = (total * jnp.float32(inv_n)).astype(out_ref.dtype)


def _choose_tile_n(rows, row_bytes, tile_n):
    if tile_n is not None:
        return max(_SUBLANES, (int(tile_n) // _SUBLANES) * _SUBLANES)
    # Target ~2 MiB per input block (double-buffered -> ~4 MiB VMEM in
    # flight): on the measured ~85% HBM-roofline plateau, yet far below the
    # scoped VMEM limit on every generation (incl. v7x's 64 MiB physical).
    target = (2 << 20) // max(1, row_bytes)
    target = max(_SUBLANES, min(2048, (target // _SUBLANES) * _SUBLANES))
    rows8 = _ceil_to(rows, _SUBLANES)
    return rows8 if rows8 <= target else target


def _choose_tile_d(d):
    # Shard the independent lane axis only when it is wide enough to matter;
    # keeps per-row DMA chunks >= 2 KiB and gives multi-TC chips (v7x) a
    # parallel grid axis. Harmless (single D tile) otherwise.
    if d >= 1024 and d % 128 == 0:
        for cand in (2048, 1024, 512):
            if d % cand == 0:
                return cand
    return d


def mean_message_aggregate(messages, *, tile_n=None):
    """Mean over axis 0 of `messages` [N, D] -> [D], computed in Pallas."""
    n, d = messages.shape
    out_dtype = messages.dtype
    if n == 0:
        # TODO(synk): PyTorch's empty branch (zeros_like(messages[0])) is
        # unreachable with static shapes; handled in plain JAX here.
        return jnp.zeros((d,), dtype=out_dtype)

    x = messages

    # Lane-dense packing for narrow message dims: view k messages per row so
    # all 128 lanes are used and the output store is an unmasked full vst.
    pack = 1
    if d < 128 and 128 % d == 0:
        pack = 128 // d
        n_pack = _ceil_to(n, pack)
        if n_pack != n:
            x = jnp.pad(x, ((0, n_pack - n), (0, 0)))
        x = x.reshape(n_pack // pack, pack * d)

    rows, dd = x.shape
    itemsize = jnp.dtype(x.dtype).itemsize

    tile_d = _choose_tile_d(dd)
    tn = _choose_tile_n(rows, tile_d * itemsize, tile_n)

    rows_pad = _ceil_to(rows, tn)
    if rows_pad != rows:
        x = jnp.pad(x, ((0, rows_pad - rows), (0, 0)))  # zero rows: sum-safe

    grid = (dd // tile_d, rows_pad // tn)
    kernel = functools.partial(_mean_agg_kernel, inv_n=1.0 / n)

    out = pl.pallas_call(
        kernel,
        out_shape=jax.ShapeDtypeStruct((1, dd), jnp.float32),
        grid_spec=pltpu.PrefetchScalarGridSpec(
            num_scalar_prefetch=0,
            grid=grid,
            in_specs=[pl.BlockSpec((tn, tile_d), lambda j, i: (i, j))],
            out_specs=pl.BlockSpec((1, tile_d), lambda j, i: (0, j)),
            scratch_shapes=[pltpu.VMEM((_SUBLANES, tile_d), jnp.float32)],
        ),
        compiler_params=pltpu.CompilerParams(
            # D axis is independent -> "parallel" (megacore sharding on v7x);
            # N axis carries the accumulator -> "arbitrary".
            dimension_semantics=("parallel", "arbitrary"),
            vmem_limit_bytes=32 << 20,
        ),
    )(x)

    if pack > 1:
        out = out.reshape(pack, d).sum(axis=0)  # fold packed segments (once)
    return out.reshape(d).astype(out_dtype)


if __name__ == "__main__":
    key = jax.random.PRNGKey(0)
    num_messages, message_dim = 8, 32  # small shapes consistent with the module
    messages = jax.random.normal(key, (num_messages, message_dim), dtype=jnp.float32)

    agg = mean_message_aggregate(messages)
    agg = jax.block_until_ready(agg)

    # Sanity check against plain-JAX reference (== torch.mean(messages, dim=0)).
    ref = jnp.mean(messages, axis=0)
    assert agg.shape == (message_dim,)
    assert jnp.allclose(agg, ref, atol=1e-5, rtol=1e-5)

    print("KERNEL_OK")
</pallas_src>

<mosaic_0001>
module attributes {stable_mosaic.version = 11 : i64} {
  func.func @_mean_agg_kernel(%arg0: i32, %arg1: i32, %arg2: memref<8x128xf32, #tpu.memory_space<vmem>>, %arg3: memref<1x128xf32, #tpu.memory_space<vmem>>, %arg4: memref<8x128xf32, #tpu.memory_space<vmem>>) attributes {dimension_semantics = [#tpu.dimension_semantics<parallel>, #tpu.dimension_semantics<arbitrary>], iteration_bounds = array<i64: 1, 1>, scalar_prefetch = 0 : i64, scratch_operands = 1 : i64, tpu.core_type = #tpu.core_type<tc>, window_params = [{transform_indices = @transform_0, window_bounds = array<i64: 8, 128>}, {transform_indices = @transform_1, window_bounds = array<i64: 1, 128>}]} {
    %c0_i32 = arith.constant 0 : i32
    %0 = arith.cmpi eq, %arg1, %c0_i32 : i32
    %1 = arith.extui %0 : i1 to i32
    %c0_i32_0 = arith.constant 0 : i32
    %2 = arith.cmpi ne, %1, %c0_i32_0 : i32
    scf.if %2 {
      %cst_8 = arith.constant 0.000000e+00 : f32
      %12 = vector.broadcast %cst_8 : f32 to vector<8x128xf32>
      %c0_9 = arith.constant 0 : index
      %c0_10 = arith.constant 0 : index
      %13 = vector.load %arg4[%c0_9, %c0_10] : memref<8x128xf32, #tpu.memory_space<vmem>>, vector<8x128xf32>
      tpu.vector_store %arg4[%c0_9, %c0_10], %12 {strides = array<i32>} : memref<8x128xf32, #tpu.memory_space<vmem>>, vector<8x128xf32>,
    } else {
    }
    %c0 = arith.constant 0 : index
    %c0_1 = arith.constant 0 : index
    %3 = vector.load %arg2[%c0, %c0_1] : memref<8x128xf32, #tpu.memory_space<vmem>>, vector<8x128xf32>
    %c0_2 = arith.constant 0 : index
    %c0_3 = arith.constant 0 : index
    %4 = vector.load %arg4[%c0_2, %c0_3] : memref<8x128xf32, #tpu.memory_space<vmem>>, vector<8x128xf32>
    %5 = vector.shape_cast %3 : vector<8x128xf32> to vector<1x8x128xf32>
    %cst = arith.constant dense<0.000000e+00> : vector<8x128xf32>
    %6 = vector.multi_reduction <add>, %5, %cst [0] : vector<1x8x128xf32> to vector<8x128xf32>
    %7 = arith.addf %4, %6 : vector<8x128xf32>
    %c0_4 = arith.constant 0 : index
    %c0_5 = arith.constant 0 : index
    %8 = vector.load %arg4[%c0_4, %c0_5] : memref<8x128xf32, #tpu.memory_space<vmem>>, vector<8x128xf32>
    tpu.vector_store %arg4[%c0_4, %c0_5], %7 {strides = array<i32>} : memref<8x128xf32, #tpu.memory_space<vmem>>, vector<8x128xf32>,
    %c0_i32_6 = arith.constant 0 : i32
    %9 = arith.cmpi eq, %arg1, %c0_i32_6 : i32
    %10 = arith.extui %9 : i1 to i32
    %c0_i32_7 = arith.constant 0 : i32
    %11 = arith.cmpi ne, %10, %c0_i32_7 : i32
    scf.if %11 {
      %c0_8 = arith.constant 0 : index
      %c0_9 = arith.constant 0 : index
      %12 = vector.load %arg4[%c0_8, %c0_9] : memref<8x128xf32, #tpu.memory_space<vmem>>, vector<8x128xf32>
      %cst_10 = arith.constant dense<0.000000e+00> : vector<128xf32>
      %13 = vector.multi_reduction <add>, %12, %cst_10 [0] : vector<8x128xf32> to vector<128xf32>
      %14 = vector.shape_cast %13 : vector<128xf32> to vector<1x128xf32>
      %cst_11 = arith.constant 1.250000e-01 : f32
      %15 = vector.broadcast %cst_11 : f32 to vector<1x128xf32>
      %16 = arith.mulf %14, %15 : vector<1x128xf32>
      %c0_12 = arith.constant 0 : index
      %c0_13 = arith.constant 0 : index
      %17 = vector.load %arg3[%c0_12, %c0_13] : memref<1x128xf32, #tpu.memory_space<vmem>>, vector<1x128xf32>
      tpu.vector_store %arg3[%c0_12, %c0_13], %16 {strides = array<i32>} : memref<1x128xf32, #tpu.memory_space<vmem>>, vector<1x128xf32>,
    } else {
    }
    return
  }
  func.func @transform_0(%arg0: i32, %arg1: i32) -> (i32, i32) {
    %c0_i32 = arith.constant 0 : i32
    return %arg1, %arg0 : i32, i32
  }
  func.func @transform_1(%arg0: i32, %arg1: i32) -> (i32, i32) {
    %c0_i32 = arith.constant 0 : i32
    %c0_i32_0 = arith.constant 0 : i32
    return %c0_i32, %arg0 : i32, i32
  }
}

</mosaic_0001>

<llo_original>
// kernel: tpu_custom_call.1
$region0: #{tpu_custom_call.1}
  #allocation0 [shape = 'u32[]', space=smem, size = 0x4, offset = 0x4, fixed_abs, tag = 'smem constant byte address 0x4 - core index']
  #allocation1 [shape = 'u32[144,128]{1,0:T(1,128)}', space=vmem, size = 0x12000, scoped, tag = 'internal scratch']
  #allocation2 [shape = 'f32[8,128]{1,0:T(8,128)}', space=vmem, size = 0x1000, scoped, tag = 'scratch operand']
  %s0 = inlined_call_operand.hbm [shape: f32[8,128], index: 0, kind: input, shape index: {}]
  %s1 = inlined_call_operand.hbm [shape: f32[1,128], index: 1, kind: output, shape index: {}]
  %s2 = sld [smem:[#allocation0]]
  $region26: #{tpu_custom_call.1} parent=0
    _
  %s4 = ssub.s32 1, %s2
  %s5 = scalar_select 0, %s4, %s2
  $region1: #{tpu_custom_call.1} parent=0
    #allocation3 [shape = 'u8[4096]{0}', space=vmem, size = 0x1000, scoped, tag = 'input window, operand 0, single buffered']
    #allocation4 [shape = 's32[1]{0}', space=sflag, size = 0x4, scoped, tag = 'scoped memory for tpu_custom_call.1']
    #allocation5 [shape = 's32[1]{0}', space=sflag, size = 0x4, scoped, tag = 'scoped memory for tpu_custom_call.1']
    #allocation6 [shape = 'u8[512]{0}', space=vmem, size = 0x400, scoped, tag = 'output window, operand 0, single buffered']
    %6 = vsyncpa [#allocation4], 0
    %7 = vsyncpa [#allocation5], 0
    // Predicated region
    $region2: #{tpu_custom_call.1} parent=1 // pred_check
      _
    $region3: #{tpu_custom_call.1} parent=1 // pred_check_branch
      %9 = sbr.rel (0) target = $region5
    $region4: #{tpu_custom_call.1} parent=1 // pred_region
      %s11 = ssub.s32 128, 128
      %12 = vsyncadd [#allocation4], %s11
      %s14 = sshll.u32 [#allocation3], 4
      %s15 = int_to_ptr.vmem [resolvable:$true] %s14
      %17 = dma.hbm_to_vmem [thread:$0]  %s0, 128, %s15, [#allocation4]
    $region5: #{tpu_custom_call.1} parent=1 // pred_fallthru
      _
    // Predicated region
    $region6: #{tpu_custom_call.1} parent=1 // pred_check
      _
    $region7: #{tpu_custom_call.1} parent=1 // pred_check_branch
      %19 = sbr.rel (0) target = $region9
    $region8: #{tpu_custom_call.1} parent=1 // pred_region
      %20 = dma.done [#allocation4], 128
    $region9: #{tpu_custom_call.1} parent=1 // pred_fallthru
      _
    %p21 = scmp.eq.s32.totalorder 0, 0
    // Predicated region
    $region10: #{tpu_custom_call.1} parent=1 // pred_check
      %p22 = pneg %p21
    $region11: #{tpu_custom_call.1} parent=1 // pred_check_branch
      %24 = sbr.rel (%p22) target = $region13
    $region12: #{tpu_custom_call.1} parent=1 // pred_region
      %25 = vst [vmem:[#allocation2] sm:$0xff] 0.0
    $region13: #{tpu_custom_call.1} parent=1 // pred_fallthru
      _
    %v26 = vld [vmem:[#allocation3] sm:$0xff]
    %v27 = vld [vmem:[#allocation2] sm:$0xff]
    %v28 = vadd.f32 %v26, 0.0
    %v29 = vadd.f32 %v27, %v28
    %30 = vst [vmem:[#allocation2] sm:$0xff] %v29
    // Predicated region
    $region14: #{tpu_custom_call.1} parent=1 // pred_check
      %p31 = pneg %p21
    $region15: #{tpu_custom_call.1} parent=1 // pred_check_branch
      %33 = sbr.rel (%p31) target = $region17
    $region16: #{tpu_custom_call.1} parent=1 // pred_region
      %v34 = vld [vmem:[#allocation2] sm:$0xff]
      %v35 = vrot.slane %v34, 4
      %v36 = vadd.f32 %v34, %v35
      %v37 = vrot.slane %v36, 2
      %v38 = vadd.f32 %v36, %v37
      %v39 = vrot.slane %v38, 1
      %v40 = vadd.f32 %v38, %v39
      %v41 = vmul.f32 %v40, 0.125
      %42 = vst [vmem:[#allocation6] sm:$0x1] %v41
    $region17: #{tpu_custom_call.1} parent=1 // pred_fallthru
      _
    // Predicated region
    $region18: #{tpu_custom_call.1} parent=1 // pred_check
      _
    $region19: #{tpu_custom_call.1} parent=1 // pred_check_branch
      %44 = sbr.rel (0) target = $region21
    $region20: #{tpu_custom_call.1} parent=1 // pred_region
      %s46 = ssub.s32 16, 16
      %47 = vsyncadd [#allocation5], %s46
      %s49 = sshll.u32 [#allocation6], 4
      %s50 = int_to_ptr.vmem [resolvable:$true] %s49
      %52 = dma.vmem_to_hbm [thread:$0]  %s50, 16, %s1, [#allocation5]
    $region21: #{tpu_custom_call.1} parent=1 // pred_fallthru
      _
    // Predicated region
    $region22: #{tpu_custom_call.1} parent=1 // pred_check
      _
    $region23: #{tpu_custom_call.1} parent=1 // pred_check_branch
      %54 = sbr.rel (0) target = $region25
    $region24: #{tpu_custom_call.1} parent=1 // pred_region
      %55 = dma.done [#allocation5], 16
    $region25: #{tpu_custom_call.1} parent=1 // pred_fallthru
      _
    %56 = vsyncpa [#allocation4], 1
    %57 = vsyncpa [#allocation5], 1

</llo_original>
